<compile_context>
chip_gen: v7x
topology: tpu7x:2x2x1
jax: 0.10.0
libtpu: 0.0.40
codegen_flags: <defaults>
</compile_context>

<pallas_src>
import jax
import jax.numpy as jnp
from jax.experimental import pallas as pl
from jax.experimental.pallas import tpu as pltpu


def _round_up(x, m):
    return ((x + m - 1) // m) * m


def _ge_measurement_kernel(zt_ref, w_ref, bk_ref, a0_ref, o_ref):
    # zt_ref: (Z+1, TB) VMEM   z^T augmented with a ones row (batch on lanes)
    # w_ref:  (K, Z+1)  VMEM   [ck | dk]  (resident across grid steps)
    # bk_ref: (1, K)    VMEM   (resident)
    # a0_ref: (1, 1)    SMEM scalar
    # o_ref:  (1, TB)   VMEM   lane-dense output tile
    h = jnp.dot(w_ref[...], zt_ref[...], preferred_element_type=jnp.float32)  # (K, TB)
    t = jnp.tanh(h)                                                           # EUP
    y = jnp.dot(bk_ref[...], t, preferred_element_type=jnp.float32)           # (1, TB) MXU reduce
    o_ref[...] = (y + a0_ref[0, 0]).astype(o_ref.dtype)


def mave_ge_measurement(z, a_0, bk, ck, dk, *, tile_budget_bytes=8 * 1024 * 1024):
    """z: (B, z_dim) f32; a_0: (1,); bk: (K,); ck: (K, z_dim); dk: (K,) -> (B, 1)."""
    B, Z = z.shape
    K = bk.shape[0]
    assert ck.shape == (K, Z)
    assert dk.shape == (K,)
    assert a_0.shape == (1,)

    f32 = jnp.float32
    z = jnp.asarray(z, f32)
    # Fold dk into the contraction: W = [ck | dk], z_aug = [z; 1].
    w = jnp.concatenate([jnp.asarray(ck, f32), jnp.asarray(dk, f32).reshape(K, 1)], axis=1)  # (K, Z+1)
    bk2 = jnp.asarray(bk, f32).reshape(1, K)
    a0 = jnp.asarray(a_0, f32).reshape(1, 1)

    # --- padding-aware batch-tile sizing -------------------------------------
    zp = _round_up(Z + 1, 8)        # sublane padding of the z^T block
    k_pad = _round_up(K, 8)         # sublane padding of H^T / tanh(H^T)
    # VMEM bytes per lane-column of one batch tile:
    #   z^T block (zp sublanes, double-buffered) + out block (8 sublanes,
    #   double-buffered) + h and tanh(h) intermediates (k_pad sublanes each).
    bytes_per_col = 4 * (2 * zp + 2 * 8 + 2 * k_pad)
    tb_cap = max(128, (tile_budget_bytes // bytes_per_col) // 128 * 128)

    b_pad = _round_up(B, 128)
    tb = min(tb_cap, b_pad)
    # Prefer >= 2 grid steps when the batch allows it (2 TensorCores on v7x).
    if b_pad >= 2 * 128 and b_pad // tb < 2:
        tb = _round_up(-(-b_pad // 2), 128)
    b_pad = _round_up(b_pad, tb)
    grid = (b_pad // tb,)

    # Build z_aug^T (Z+1, b_pad): lane-dense DMAs into the kernel.
    zt = jnp.concatenate([z.T, jnp.ones((1, B), f32)], axis=0)  # (Z+1, B)
    if b_pad != B:
        zt = jnp.pad(zt, ((0, 0), (0, b_pad - B)))

    vmem_limit = int(min(32 * 1024 * 1024,
                         max(bytes_per_col * tb + (2 << 20), 4 << 20)))

    cost = pl.CostEstimate(
        flops=2 * b_pad * (Z + 1) * K + 2 * b_pad * K,
        transcendentals=b_pad * K,
        bytes_accessed=(Z + 1) * b_pad * 4 + K * (Z + 1) * 4 + K * 4 + b_pad * 4,
    )

    out = pl.pallas_call(
        _ge_measurement_kernel,
        out_shape=jax.ShapeDtypeStruct((1, b_pad), f32),
        grid=grid,
        in_specs=[
            pl.BlockSpec((Z + 1, tb), lambda i: (0, i)),            # z_aug^T (streamed, lane-dense)
            pl.BlockSpec((K, Z + 1), lambda i: (0, 0)),             # [ck | dk] (resident)
            pl.BlockSpec((1, K), lambda i: (0, 0)),                 # bk (resident)
            pl.BlockSpec(memory_space=pltpu.MemorySpace.SMEM),      # a_0 scalar
        ],
        out_specs=pl.BlockSpec((1, tb), lambda i: (0, i)),
        compiler_params=pltpu.CompilerParams(
            dimension_semantics=("parallel",),
            vmem_limit_bytes=vmem_limit,
        ),
        cost_estimate=cost,
    )(zt, w, bk2, a0)

    return out[0, :B].reshape(B, 1)


if __name__ == "__main__":
    # Small shapes consistent with the module's forward.
    model_params = {"num_hidden_nodes": 20, "z_dim": 4}
    K = model_params["num_hidden_nodes"]
    Z = model_params["z_dim"]
    batch = 8

    key = jax.random.PRNGKey(0)
    k_a0, k_bk, k_ck, k_dk, k_z = jax.random.split(key, 5)

    # torch.randn-style parameter init (deterministic via JAX PRNG).
    a_0 = jax.random.normal(k_a0, (1,), dtype=jnp.float32)
    bk = jax.random.normal(k_bk, (K,), dtype=jnp.float32)
    ck = jax.random.normal(k_ck, (K, Z), dtype=jnp.float32)
    dk = jax.random.normal(k_dk, (K,), dtype=jnp.float32)

    z = jax.random.normal(k_z, (batch, Z), dtype=jnp.float32)

    out = mave_ge_measurement(z, a_0, bk, ck, dk)
    out = jax.block_until_ready(out)

    # Pure-JAX reference: a_0 + sum_k bk * tanh(z @ ck^T + dk), per row.
    ref = a_0 + jnp.sum(bk * jnp.tanh(z @ ck.T + dk), axis=-1, keepdims=True)

    assert out.shape == (batch, 1)
    assert jnp.allclose(out, ref, atol=1e-3, rtol=1e-3), (out, ref)

    print("KERNEL_OK")
</pallas_src>

<mosaic_0001>
module attributes {stable_mosaic.version = 11 : i64} {
  func.func @_ge_measurement_kernel(%arg0: i32, %arg1: memref<5x128xf32, #tpu.memory_space<vmem>>, %arg2: memref<20x5xf32, #tpu.memory_space<vmem>>, %arg3: memref<1x20xf32, #tpu.memory_space<vmem>>, %arg4: memref<1x1xf32, #tpu.memory_space<smem>>, %arg5: memref<1x128xf32, #tpu.memory_space<vmem>>) attributes {dimension_semantics = [#tpu.dimension_semantics<parallel>], iteration_bounds = array<i64: 1>, scalar_prefetch = 0 : i64, scratch_operands = 0 : i64, tpu.core_type = #tpu.core_type<tc>, window_params = [{transform_indices = @transform_0, window_bounds = array<i64: 5, 128>}, {pipeline_mode = #tpu.pipeline_mode<synchronous>, transform_indices = @transform_1, window_bounds = array<i64: 20, 5>}, {pipeline_mode = #tpu.pipeline_mode<synchronous>, transform_indices = @transform_2, window_bounds = array<i64: 1, 20>}, {transform_indices = @transform_3, window_bounds = array<i64: 1, 1>}, {transform_indices = @transform_4, window_bounds = array<i64: 1, 128>}]} {
    %c0 = arith.constant 0 : index
    %c0_0 = arith.constant 0 : index
    %0 = vector.load %arg2[%c0, %c0_0] : memref<20x5xf32, #tpu.memory_space<vmem>>, vector<20x5xf32>
    %c0_1 = arith.constant 0 : index
    %c0_2 = arith.constant 0 : index
    %1 = vector.load %arg1[%c0_1, %c0_2] : memref<5x128xf32, #tpu.memory_space<vmem>>, vector<5x128xf32>
    %cst = arith.constant dense<0.000000e+00> : vector<20x128xf32>
    %2 = tpu.matmul %0, %1, %cst {dimension_numbers = #tpu.dot_dimension_numbers<[1], [0], [0], [1], [0, 0, 1, 1], [], []>} : vector<20x5xf32>, vector<5x128xf32>, vector<20x128xf32> -> vector<20x128xf32>
    %3 = math.tanh %2 : vector<20x128xf32>
    %c0_3 = arith.constant 0 : index
    %c0_4 = arith.constant 0 : index
    %4 = vector.load %arg3[%c0_3, %c0_4] : memref<1x20xf32, #tpu.memory_space<vmem>>, vector<1x20xf32>
    %cst_5 = arith.constant dense<0.000000e+00> : vector<1x128xf32>
    %5 = tpu.matmul %4, %3, %cst_5 {dimension_numbers = #tpu.dot_dimension_numbers<[1], [0], [0], [1], [0, 0, 1, 1], [], []>} : vector<1x20xf32>, vector<20x128xf32>, vector<1x128xf32> -> vector<1x128xf32>
    %c0_6 = arith.constant 0 : index
    %c0_7 = arith.constant 0 : index
    %6 = memref.load %arg4[%c0_6, %c0_7] : memref<1x1xf32, #tpu.memory_space<smem>>
    %7 = vector.broadcast %6 : f32 to vector<1x128xf32>
    %8 = arith.addf %5, %7 : vector<1x128xf32>
    %c0_8 = arith.constant 0 : index
    %c0_9 = arith.constant 0 : index
    %9 = vector.load %arg5[%c0_8, %c0_9] : memref<1x128xf32, #tpu.memory_space<vmem>>, vector<1x128xf32>
    tpu.vector_store %arg5[%c0_8, %c0_9], %8 {strides = array<i32>} : memref<1x128xf32, #tpu.memory_space<vmem>>, vector<1x128xf32>,
    return
  }
  func.func @transform_0(%arg0: i32) -> (i32, i32) {
    %c0_i32 = arith.constant 0 : i32
    %c0_i32_0 = arith.constant 0 : i32
    return %c0_i32, %arg0 : i32, i32
  }
  func.func @transform_1(%arg0: i32) -> (i32, i32) {
    %c0_i32 = arith.constant 0 : i32
    %c0_i32_0 = arith.constant 0 : i32
    %c0_i32_1 = arith.constant 0 : i32
    return %c0_i32, %c0_i32_0 : i32, i32
  }
  func.func @transform_2(%arg0: i32) -> (i32, i32) {
    %c0_i32 = arith.constant 0 : i32
    %c0_i32_0 = arith.constant 0 : i32
    %c0_i32_1 = arith.constant 0 : i32
    return %c0_i32, %c0_i32_0 : i32, i32
  }
  func.func @transform_3(%arg0: i32) -> (i32, i32) {
    %c0_i32 = arith.constant 0 : i32
    %c0_i32_0 = arith.constant 0 : i32
    %c0_i32_1 = arith.constant 0 : i32
    return %c0_i32, %c0_i32_0 : i32, i32
  }
  func.func @transform_4(%arg0: i32) -> (i32, i32) {
    %c0_i32 = arith.constant 0 : i32
    %c0_i32_0 = arith.constant 0 : i32
    return %c0_i32, %arg0 : i32, i32
  }
}

</mosaic_0001>

<llo_original>
// kernel: tpu_custom_call.1
$region0: #{tpu_custom_call.1}
  #allocation0 [shape = 'u32[]', space=smem, size = 0x4, offset = 0x4, fixed_abs, tag = 'smem constant byte address 0x4 - core index']
  #allocation1 [shape = 'u32[144,128]{1,0:T(1,128)}', space=vmem, size = 0x12000, scoped, tag = 'internal scratch']
  #allocation2 [shape = 'f32[1,1]{1,0:T(1,128)S(6)}', space=smem, size = 0x200, scoped, tag = 'scoped memory for tpu_custom_call.1']
  %s0 = inlined_call_operand.vmem [shape: f32[5,128], index: 0, kind: input, shape index: {}]
  %s1 = inlined_call_operand.vmem [shape: f32[20,5], index: 1, kind: input, shape index: {}]
  %s2 = inlined_call_operand.vmem [shape: f32[1,20], index: 2, kind: input, shape index: {}]
  %s3 = inlined_call_operand.<no memory space> [shape: f32[1,1], index: 3, kind: input, shape index: {}]
  %s4 = inlined_call_operand.hbm [shape: f32[1,128], index: 4, kind: output, shape index: {}]
  %s5 = sld [smem:[#allocation0]]
  $region26: #{tpu_custom_call.1} parent=0
    _
  %s7 = ssub.s32 1, %s5
  %s8 = scalar_select 0, %s7, %s5
  %9 = sst [smem:[#allocation2]] %s3
  $region1: #{tpu_custom_call.1} parent=0
    #allocation3 [shape = 'u8[512]{0}', space=vmem, size = 0x400, scoped, tag = 'output window, operand 0, single buffered']
    #allocation4 [shape = 's32[1]{0}', space=sflag, size = 0x4, scoped, tag = 'scoped memory for tpu_custom_call.1']
    %10 = vsyncpa [#allocation4], 0
    // Predicated region
    $region2: #{tpu_custom_call.1} parent=1 // pred_check
      _
    $region3: #{tpu_custom_call.1} parent=1 // pred_check_branch
      %12 = sbr.rel (0) target = $region5
    $region4: #{tpu_custom_call.1} parent=1 // pred_region
      _
    $region5: #{tpu_custom_call.1} parent=1 // pred_fallthru
      _
    // Predicated region
    $region6: #{tpu_custom_call.1} parent=1 // pred_check
      _
    $region7: #{tpu_custom_call.1} parent=1 // pred_check_branch
      %14 = sbr.rel (0) target = $region9
    $region8: #{tpu_custom_call.1} parent=1 // pred_region
      _
    $region9: #{tpu_custom_call.1} parent=1 // pred_fallthru
      _
    // Predicated region
    $region10: #{tpu_custom_call.1} parent=1 // pred_check
      _
    $region11: #{tpu_custom_call.1} parent=1 // pred_check_branch
      %16 = sbr.rel (0) target = $region13
    $region12: #{tpu_custom_call.1} parent=1 // pred_region
      _
    $region13: #{tpu_custom_call.1} parent=1 // pred_fallthru
      _
    // Predicated region
    $region14: #{tpu_custom_call.1} parent=1 // pred_check
      _
    $region15: #{tpu_custom_call.1} parent=1 // pred_check_branch
      %18 = sbr.rel (0) target = $region17
    $region16: #{tpu_custom_call.1} parent=1 // pred_region
      _
    $region17: #{tpu_custom_call.1} parent=1 // pred_fallthru
      _
    %v19 = vld [vmem:[%s1] sm:$0xff]
    %v20 = vld [vmem:[%s1 + $0x8] sm:$0xff]
    %v21 = vld [vmem:[%s1 + $0x10] sm:$0xf]
    %v22 = vld [vmem:[%s0] sm:$0x1f]
    %vm23 = vcmask 39936
    %v25 = vsel %vm23, %v19, 0
    %v28 = vsel %vm23, %v20, 0
    %v31 = vsel %vm23, %v21, 0
    %vm33 = vcmask 1044480
    %v35 = vsel %vm33, %v22, 0
    %37 = vmatprep.subr.mxu0 0.0
    %38 = vmatpush1.msra.mxu0 %v35
    %39 = vmatprep.subr.mxu0 0.0
    %40 = vmatpush1.msra.mxu0 0.0
    %41 = vmatprep.subr.mxu0 0.0
    %42 = vmatpush1.msra.mxu0 0.0
    %43 = vmatprep.subr.mxu0 0.0
    %44 = vmatpush1.msra.mxu0 0.0
    %45 = vmatprep.subr.mxu0 0.0
    %46 = vmatpush1.msra.mxu0 0.0
    %47 = vmatprep.subr.mxu0 0.0
    %48 = vmatpush1.msra.mxu0 0.0
    %49 = vmatprep.subr.mxu0 0.0
    %50 = vmatpush1.msra.mxu0 0.0
    %51 = vmatprep.subr.mxu0 0.0
    %52 = vmatpush1.msra.mxu0 0.0
    %53 = vmatprep.subr.mxu0 0.0
    %54 = vmatpush1.msra.mxu0 0.0
    %55 = vmatprep.subr.mxu0 0.0
    %56 = vmatpush1.msra.mxu0 0.0
    %57 = vmatprep.subr.mxu0 0.0
    %58 = vmatpush1.msra.mxu0 0.0
    %59 = vmatprep.subr.mxu0 0.0
    %60 = vmatpush1.msra.mxu0 0.0
    %61 = vmatprep.subr.mxu0 0.0
    %62 = vmatpush1.msra.mxu0 0.0
    %63 = vmatprep.subr.mxu0 0.0
    %64 = vmatpush1.msra.mxu0 0.0
    %65 = vmatprep.subr.mxu0 0.0
    %66 = vmatpush1.msra.mxu0 0.0
    %67 = vmatprep.subr.mxu0 0.0
    %68 = vmatpush1.msra.mxu0 0.0
    %69 = vmatprep.subr.mxu0 0.0
    %70 = vmatpush1.msra.mxu0 0.0
    %71 = vmatprep.subr.mxu0 0.0
    %72 = vmatpush1.msra.mxu0 0.0
    %73 = vmatprep.subr.mxu0 0.0
    %74 = vmatpush1.msra.mxu0 0.0
    %75 = vmatprep.subr.mxu0 0.0
    %76 = vmatpush1.msra.mxu0 0.0
    %77 = vmatprep.subr.mxu0 0.0
    %78 = vmatpush1.msra.mxu0 0.0
    %79 = vmatprep.subr.mxu0 0.0
    %80 = vmatpush1.msra.mxu0 0.0
    %81 = vmatprep.subr.mxu0 0.0
    %82 = vmatpush1.msra.mxu0 0.0
    %83 = vmatprep.subr.mxu0 0.0
    %84 = vmatpush1.msra.mxu0 0.0
    %85 = vmatprep.subr.mxu0 0.0
    %86 = vmatpush1.msra.mxu0 0.0
    %87 = vmatprep.subr.mxu0 0.0
    %88 = vmatpush1.msra.mxu0 0.0
    %89 = vmatprep.subr.mxu0 0.0
    %90 = vmatpush1.msra.mxu0 0.0
    %91 = vmatprep.subr.mxu0 0.0
    %92 = vmatpush1.msra.mxu0 0.0
    %93 = vmatprep.subr.mxu0 0.0
    %94 = vmatpush1.msra.mxu0 0.0
    %95 = vmatprep.subr.mxu0 0.0
    %96 = vmatpush1.msra.mxu0 0.0
    %97 = vmatprep.subr.mxu0 0.0
    %98 = vmatpush1.msra.mxu0 0.0
    %99 = vmatprep.subr.mxu0 0.0
    %100 = vmatpush1.msra.mxu0 0.0
    %101 = vmatprep.mubr.f32.mxu0 0.0
    %102 = vmatmul.mubr.f32.gmra.mrb[0].mxu0 %v25
    %v103 = vpop.f32.mrb[0].mxu0
    %v104 = vadd.f32 0.0, %v103
    %v105 = vpop.f32.mrb[0].mxu0
    %106 = vmatprep.mubr.f32.mxu0 0.0
    %107 = vmatmul.mubr.f32.gmra.mrb[0].mxu0 %v28
    %v108 = vpop.f32.mrb[0].mxu0
    %v109 = vadd.f32 0.0, %v108
    %v110 = vpop.f32.mrb[0].mxu0
    %111 = vmatprep.mubr.f32.mxu0 0.0
    %112 = vmatmul.mubr.f32.gmra.mrb[0].mxu0 %v31
    %v113 = vpop.f32.mrb[0].mxu0
    %v114 = vadd.f32 0.0, %v113
    %v115 = vpop.f32.mrb[0].mxu0
    %116 = vdwg.mxu0
    %v117 = vtanh.pop %v104
    %v118 = vtanh.pop %v109
    %v119 = vtanh.pop %v114
    %v120 = vld [vmem:[%s2] sm:$0x1]
    %s121 = sld [smem:[#allocation2]]
    %v122 = vstv %s121
    %vm123 = vcmask 162816
    %v125 = vsel %vm123, %v120, 0
    %vm127 = vcmask 1043456
    %v129 = vsel %vm127, %v119, 0
    %131 = vmatprep.subr.mxu0 0.0
    %132 = vmatpush1.msra.mxu0 %v117
    %133 = vmatprep.subr.mxu0 0.0
    %134 = vmatpush1.msra.mxu0 %v118
    %135 = vmatprep.subr.mxu0 0.0
    %136 = vmatpush1.msra.mxu0 %v129
    %137 = vmatprep.subr.mxu0 0.0
    %138 = vmatpush1.msra.mxu0 0.0
    %139 = vmatprep.subr.mxu0 0.0
    %140 = vmatpush1.msra.mxu0 0.0
    %141 = vmatprep.subr.mxu0 0.0
    %142 = vmatpush1.msra.mxu0 0.0
    %143 = vmatprep.subr.mxu0 0.0
    %144 = vmatpush1.msra.mxu0 0.0
    %145 = vmatprep.subr.mxu0 0.0
    %146 = vmatpush1.msra.mxu0 0.0
    %147 = vmatprep.subr.mxu0 0.0
    %148 = vmatpush1.msra.mxu0 0.0
    %149 = vmatprep.subr.mxu0 0.0
    %150 = vmatpush1.msra.mxu0 0.0
    %151 = vmatprep.subr.mxu0 0.0
    %152 = vmatpush1.msra.mxu0 0.0
    %153 = vmatprep.subr.mxu0 0.0
    %154 = vmatpush1.msra.mxu0 0.0
    %155 = vmatprep.subr.mxu0 0.0
    %156 = vmatpush1.msra.mxu0 0.0
    %157 = vmatprep.subr.mxu0 0.0
    %158 = vmatpush1.msra.mxu0 0.0
    %159 = vmatprep.subr.mxu0 0.0
    %160 = vmatpush1.msra.mxu0 0.0
    %161 = vmatprep.subr.mxu0 0.0
    %162 = vmatpush1.msra.mxu0 0.0
    %163 = vmatprep.subr.mxu0 0.0
    %164 = vmatpush1.msra.mxu0 0.0
    %165 = vmatprep.subr.mxu0 0.0
    %166 = vmatpush1.msra.mxu0 0.0
    %167 = vmatprep.subr.mxu0 0.0
    %168 = vmatpush1.msra.mxu0 0.0
    %169 = vmatprep.subr.mxu0 0.0
    %170 = vmatpush1.msra.mxu0 0.0
    %171 = vmatprep.subr.mxu0 0.0
    %172 = vmatpush1.msra.mxu0 0.0
    %173 = vmatprep.subr.mxu0 0.0
    %174 = vmatpush1.msra.mxu0 0.0
    %175 = vmatprep.subr.mxu0 0.0
    %176 = vmatpush1.msra.mxu0 0.0
    %177 = vmatprep.subr.mxu0 0.0
    %178 = vmatpush1.msra.mxu0 0.0
    %179 = vmatprep.subr.mxu0 0.0
    %180 = vmatpush1.msra.mxu0 0.0
    %181 = vmatprep.subr.mxu0 0.0
    %182 = vmatpush1.msra.mxu0 0.0
    %183 = vmatprep.subr.mxu0 0.0
    %184 = vmatpush1.msra.mxu0 0.0
    %185 = vmatprep.subr.mxu0 0.0
    %186 = vmatpush1.msra.mxu0 0.0
    %187 = vmatprep.subr.mxu0 0.0
    %188 = vmatpush1.msra.mxu0 0.0
    %189 = vmatprep.subr.mxu0 0.0
    %190 = vmatpush1.msra.mxu0 0.0
    %191 = vmatprep.subr.mxu0 0.0
    %192 = vmatpush1.msra.mxu0 0.0
    %193 = vmatprep.subr.mxu0 0.0
    %194 = vmatpush1.msra.mxu0 0.0
    %195 = vmatprep.mubr.f32.mxu0 0.0
    %196 = vmatmul.mubr.f32.gmra.mrb[0].mxu0 %v125
    %v197 = vpop.f32.mrb[0].mxu0
    %v198 = vadd.f32 %v122, %v197
    %v199 = vpop.f32.mrb[0].mxu0
    %200 = vdwg.mxu0
    %201 = vst [vmem:[#allocation3] sm:$0x1] %v198
    // Predicated region
    $region18: #{tpu_custom_call.1} parent=1 // pred_check
      _
    $region19: #{tpu_custom_call.1} parent=1 // pred_check_branch
      %203 = sbr.rel (0) target = $region21
    $region20: #{tpu_custom_call.1} parent=1 // pred_region
      %s205 = ssub.s32 16, 16
      %206 = vsyncadd [#allocation4], %s205
      %s208 = sshll.u32 [#allocation3], 4
      %s209 = int_to_ptr.vmem [resolvable:$true] %s208
      %211 = dma.vmem_to_hbm [thread:$0]  %s209, 16, %s4, [#allocation4]
    $region21: #{tpu_custom_call.1} parent=1 // pred_fallthru
      _
    // Predicated region
    $region22: #{tpu_custom_call.1} parent=1 // pred_check
      _
    $region23: #{tpu_custom_call.1} parent=1 // pred_check_branch
      %213 = sbr.rel (0) target = $region25
    $region24: #{tpu_custom_call.1} parent=1 // pred_region
      %214 = dma.done [#allocation4], 16
    $region25: #{tpu_custom_call.1} parent=1 // pred_fallthru
      _
    %215 = vsyncpa [#allocation4], 1

</llo_original>
